<compile_context>
chip_gen: v5e
topology: v5e:2x2
jax: 0.10.0
libtpu: 0.0.40
codegen_flags: <defaults>
</compile_context>

<pallas_src>
import functools

import jax
import jax.numpy as jnp
from jax import lax
from jax.experimental import pallas as pl
from jax.experimental.pallas import tpu as pltpu


# -----------------------------------------------------------------------------
# Kernel
# -----------------------------------------------------------------------------
def _causal_shift(a, s, masks):
    """Right-shift `a` by `s` lanes, zeros flowing in at every sample start.

    The roll's wrap-around (and any cross-sample leak) lands only on columns
    whose in-sample position is < s, and those are zeroed by the mask, so the
    result is exact for any s (including s >= block width).
    """
    if s == 0:
        return a
    rolled = jnp.roll(a, s, axis=1)
    return jnp.where(masks[s], rolled, jnp.zeros_like(rolled))


def temporal_block_kernel(x_ref, w1_ref, b1_ref, w2_ref, b2_ref, wd_ref, bd_ref,
                          o_ref, *, shifts, length):
    # x_ref : (C_in, T)          bf16 activations, T = b_blk * L (whole samples)
    # w1_ref: (K, C_out, C_in)   bf16, one (C_out, C_in) slab per dilated tap
    # w2_ref: (K, C_out, C_out)  bf16
    # wd_ref: (C_out, C_in)      bf16 1x1 downsample (identity eye if absent)
    # b*_ref: (C_out, 1)         f32
    # o_ref : (C_out, T)         f32 or bf16
    x = x_ref[...]
    t = x.shape[1]

    # Lane position of each column within its own sample, computed in-kernel
    # (blocks always hold whole samples) -- no pos input stream from HBM.
    pos = lax.broadcasted_iota(jnp.int32, (1, t), 1) % length
    # Causal masks built once and shared by both convs.
    masks = {s: pos >= s for s in sorted(set(shifts)) if s > 0}

    def causal_conv(w_ref, a):
        # K accumulating MXU matmuls, one per dilated tap; f32 accumulation.
        acc = None
        for j, s in enumerate(shifts):
            tap = _causal_shift(a, s, masks)
            y = jnp.dot(w_ref[j], tap, preferred_element_type=jnp.float32)
            acc = y if acc is None else acc + y
        return acc

    h1 = jnp.maximum(causal_conv(w1_ref, x) + b1_ref[...], 0.0)   # relu1 (dropout1=id)
    h2 = jnp.maximum(causal_conv(w2_ref, h1.astype(x.dtype)) + b2_ref[...], 0.0)
    res = jnp.dot(wd_ref[...], x, preferred_element_type=jnp.float32) + bd_ref[...]
    o_ref[...] = jnp.maximum(h2 + res, 0.0).astype(o_ref.dtype)


# -----------------------------------------------------------------------------
# Block sizing / VMEM budgeting
# -----------------------------------------------------------------------------
@functools.lru_cache(maxsize=None)
def _vmem_budget_bytes():
    """Scoped-VMEM budget: ~70% of physical, capped at 80 MiB.

    v7x (64 MiB physical) -> ~45 MiB;  v5e/v6e (128 MiB physical) -> 80 MiB.
    Passed to vmem_limit_bytes (also lifts v5e's 16 MiB default scoped limit).
    """
    cap = 64 * 1024 * 1024                     # conservative default (v7x-sized)
    try:
        cap = int(pltpu.get_tpu_info().vmem_capacity_bytes)
    except Exception:                          # CPU / interpret / older API
        pass
    return min(int(0.70 * cap), 80 * 1024 * 1024)


def _bytes_per_lane_column(c_in, c_out, out_itemsize):
    """Rough live VMEM bytes per lane column of one grid step (per-tap path)."""
    io = 2 * (2 * c_in) + 2 * (out_itemsize * c_out)   # double-buffered x / out blocks
    acc = 3 * 4 * c_out + 2 * c_out                    # f32 h1/h2/res + bf16 h1 copy
    taps = 2 * 2 * max(c_in, c_out)                    # ~2 live shifted-tap temps (bf16)
    return int(1.5 * (io + acc + taps + 16))           # fudge: masks / compiler temps


def _pick_batch_block(n, length, target_lanes, min_steps):
    """Samples per grid step.  Blocks hold whole samples; prefer lane widths
    that are multiples of 128 (unmasked vst, tile-aligned DMA), fit within
    `target_lanes`, and leave >= `min_steps` grid steps (v7x megacore)."""
    divisors = [b for b in range(1, n + 1) if n % b == 0]

    def aligned(b):            # multiple of 128 lanes, or the full lane extent
        return (b * length) % 128 == 0 or b == n

    for b in sorted(divisors, reverse=True):
        if aligned(b) and b * length <= target_lanes and n // b >= min_steps:
            return b
    for b in sorted(divisors, reverse=True):
        if aligned(b) and b * length <= target_lanes:
            return b
    for b in sorted(divisors):                 # nothing fits target: smallest legal
        if aligned(b):
            return b
    return n                                   # full batch: full-dim block, always legal


# -----------------------------------------------------------------------------
# Wrappers
# -----------------------------------------------------------------------------
def prepare_temporal_block_params(params, *, kernel_size, c_in,
                                  compute_dtype=jnp.bfloat16):
    """Flatten PyTorch-layout TemporalBlock params for the kernel (do once).

    w1/w2 (C_out, C_in, K) -> (K, C_out, C_in) per-tap slabs in compute dtype.
    A missing downsample (n_inputs == n_outputs) becomes an identity 1x1 conv.
    """
    w1, b1, w2, b2 = params["w1"], params["b1"], params["w2"], params["b2"]
    c_out = w1.shape[0]
    wd, bd = params.get("wd"), params.get("bd")
    if wd is None:
        wd = jnp.eye(c_out, c_in, dtype=jnp.float32)
        bd = jnp.zeros((c_out,), jnp.float32)
    del kernel_size  # implied by w1.shape[-1]
    return {
        "w1": jnp.transpose(w1, (2, 0, 1)).astype(compute_dtype),
        "w2": jnp.transpose(w2, (2, 0, 1)).astype(compute_dtype),
        "wd": wd.astype(compute_dtype),
        "b1": b1.reshape(c_out, 1).astype(jnp.float32),
        "b2": b2.reshape(c_out, 1).astype(jnp.float32),
        "bd": bd.reshape(c_out, 1).astype(jnp.float32),
    }


def temporal_block_cm(x_cm, flat, *, kernel_size, dilation, padding, n, length,
                      out_dtype=None):
    """Channels-major TemporalBlock: x_cm (C_in, N*L) compute-dtype (bf16) ->
    (C_out, N*L) in `out_dtype` (defaults to x_cm.dtype so stacked blocks chain
    in bf16 with no HBM relayout between them)."""
    c_in, total = x_cm.shape
    if total != n * length:
        raise ValueError("x_cm must have shape (C_in, n*length)")
    k, d, p = kernel_size, dilation, padding
    if p != (k - 1) * d:
        raise ValueError("residual add requires padding == (kernel_size-1)*dilation")
    if flat["w1"].shape[0] != k or flat["w1"].shape[2] != c_in:
        raise ValueError("params not prepared for this kernel_size / c_in")
    c_out = flat["w1"].shape[1]
    out_dtype = x_cm.dtype if out_dtype is None else out_dtype
    out_itemsize = jnp.dtype(out_dtype).itemsize

    # Lane-block sizing: large blocks amortize the ~0.35 us per-grid-step
    # overhead; capped by the per-generation VMEM budget (v7x 64 MiB physical
    # vs v5e/v6e 128 MiB) and at 16384 lanes.
    budget = _vmem_budget_bytes()
    bpc = _bytes_per_lane_column(c_in, c_out, out_itemsize)
    target_lanes = max(128, min(16384, (budget // bpc) // 128 * 128))
    min_steps = 2 if n >= 2 else 1             # keep both v7x TensorCores busy
    b_blk = _pick_batch_block(n, length, target_lanes, min_steps)
    t_blk = b_blk * length
    grid = (n // b_blk,)

    shifts = tuple(p - j * d for j in range(k))    # per-tap causal right shift
    kernel = functools.partial(temporal_block_kernel, shifts=shifts, length=length)

    flops = 2 * total * c_out * (k * c_in + k * c_out + c_in)
    bytes_accessed = (x_cm.dtype.itemsize * c_in * total
                      + out_itemsize * c_out * total
                      + 2 * (k * c_out * c_in + k * c_out * c_out + c_out * c_in)
                      + 4 * 3 * c_out)

    return pl.pallas_call(
        kernel,
        out_shape=jax.ShapeDtypeStruct((c_out, total), out_dtype),
        grid_spec=pltpu.PrefetchScalarGridSpec(
            num_scalar_prefetch=0,
            grid=grid,
            in_specs=[
                pl.BlockSpec((c_in, t_blk), lambda i: (0, i)),          # x
                pl.BlockSpec((k, c_out, c_in), lambda i: (0, 0, 0)),    # w1 taps
                pl.BlockSpec((c_out, 1), lambda i: (0, 0)),             # b1
                pl.BlockSpec((k, c_out, c_out), lambda i: (0, 0, 0)),   # w2 taps
                pl.BlockSpec((c_out, 1), lambda i: (0, 0)),             # b2
                pl.BlockSpec((c_out, c_in), lambda i: (0, 0)),          # wd
                pl.BlockSpec((c_out, 1), lambda i: (0, 0)),             # bd
            ],
            out_specs=pl.BlockSpec((c_out, t_blk), lambda i: (0, i)),
        ),
        compiler_params=pltpu.CompilerParams(
            dimension_semantics=("parallel",),     # batch blocks are independent
            vmem_limit_bytes=int(budget),          # v5e: raise 16 MiB default; v7x: cap
        ),
        cost_estimate=pl.CostEstimate(
            flops=int(flops), transcendentals=0, bytes_accessed=int(bytes_accessed)),
    )(x_cm, flat["w1"], flat["b1"], flat["w2"], flat["b2"], flat["wd"], flat["bd"])


def temporal_block(x, params, *, kernel_size, dilation, padding,
                   compute_dtype=jnp.bfloat16, out_dtype=jnp.float32):
    """PyTorch-layout entry point: x (N, C_in, L) f32 -> (N, C_out, L) out_dtype.
    Does the one-time (N,C,L) <-> (C, N*L) conversion; when stacking blocks use
    temporal_block_cm directly and convert only at the model boundary."""
    n, c_in, length = x.shape
    flat = prepare_temporal_block_params(params, kernel_size=kernel_size,
                                         c_in=c_in, compute_dtype=compute_dtype)
    x_cm = jnp.transpose(x, (1, 0, 2)).reshape(c_in, n * length).astype(compute_dtype)
    out_cm = temporal_block_cm(x_cm, flat, kernel_size=kernel_size,
                               dilation=dilation, padding=padding,
                               n=n, length=length, out_dtype=out_dtype)
    c_out = out_cm.shape[0]
    return jnp.transpose(out_cm.reshape(c_out, n, length), (1, 0, 2))


# -----------------------------------------------------------------------------
# Pure-JAX reference (mirrors the PyTorch forward) for correctness checks.
# operand_dtype=jnp.bfloat16 reproduces the kernel's bf16-operand / f32-accum
# matmul numerics; operand_dtype=jnp.float32 is the full-precision reference.
# -----------------------------------------------------------------------------
def temporal_block_ref(x, params, *, kernel_size, dilation, padding,
                       operand_dtype=jnp.float32):
    dn = ("NCH", "OIH", "NCH")

    def conv(inp, w, b, dil, pad):
        y = lax.conv_general_dilated(
            inp.astype(operand_dtype), w.astype(operand_dtype),
            window_strides=(1,), padding=[(pad, pad)], rhs_dilation=(dil,),
            dimension_numbers=dn, preferred_element_type=jnp.float32)
        return y + b[None, :, None]

    p = padding
    out = conv(x, params["w1"], params["b1"], dilation, p)[:, :, :-p]    # chomp1
    out = jnp.maximum(out, 0.0)                                          # relu1
    out = conv(out, params["w2"], params["b2"], dilation, p)[:, :, :-p]  # chomp2
    out = jnp.maximum(out, 0.0)                                          # relu2
    if params.get("wd") is None:
        res = x
    else:
        res = conv(x, params["wd"][:, :, None], params["bd"], 1, 0)      # 1x1
    return jnp.maximum(out + res, 0.0)


# -----------------------------------------------------------------------------
# Deterministic synthetic parameters (weight_norm reparametrization applied).
# -----------------------------------------------------------------------------
def make_params(key, c_in, c_out, kernel_size, with_downsample=True):
    ks = jax.random.split(key, 8)

    def weight_norm(v, g):
        # PyTorch weight_norm default dim=0: per-output-channel norm over (in, k).
        norm = jnp.sqrt(jnp.sum(v * v, axis=tuple(range(1, v.ndim)), keepdims=True))
        return g.reshape((-1,) + (1,) * (v.ndim - 1)) * v / norm

    v1 = 0.01 * jax.random.normal(ks[0], (c_out, c_in, kernel_size), jnp.float32)
    g1 = 1.0 + 0.1 * jax.random.normal(ks[1], (c_out,), jnp.float32)
    v2 = 0.01 * jax.random.normal(ks[2], (c_out, c_out, kernel_size), jnp.float32)
    g2 = 1.0 + 0.1 * jax.random.normal(ks[3], (c_out,), jnp.float32)
    params = {
        "w1": weight_norm(v1, jnp.abs(g1)),
        "b1": 0.01 * jax.random.normal(ks[4], (c_out,), jnp.float32),
        "w2": weight_norm(v2, jnp.abs(g2)),
        "b2": 0.01 * jax.random.normal(ks[5], (c_out,), jnp.float32),
    }
    if with_downsample:
        params["wd"] = 0.01 * jax.random.normal(ks[6], (c_out, c_in), jnp.float32)
        params["bd"] = 0.01 * jax.random.normal(ks[7], (c_out,), jnp.float32)
    return params


if __name__ == "__main__":
    key = jax.random.PRNGKey(0)
    k_x, k_p, k_x2, k_pa, k_pb = jax.random.split(key, 5)

    # --- Test 1: TemporalBlock(4, 8, kernel_size=3, stride=1, dilation=2,
    #     padding=4) on x of shape (N=2, C_in=4, L=16), f32 output. -------------
    N, C_IN, C_OUT, L, K, DIL = 2, 4, 8, 16, 3, 2
    PAD = (K - 1) * DIL
    x = jax.random.normal(k_x, (N, C_IN, L), jnp.float32)
    params = make_params(k_p, C_IN, C_OUT, K)

    out = jax.block_until_ready(
        temporal_block(x, params, kernel_size=K, dilation=DIL, padding=PAD))
    assert out.shape == (N, C_OUT, L)

    # Tight check vs a reference with matching bf16-operand / f32-accum numerics.
    ref_q = temporal_block_ref(x, params, kernel_size=K, dilation=DIL, padding=PAD,
                               operand_dtype=jnp.bfloat16)
    assert jnp.allclose(out, ref_q, atol=1e-2, rtol=1e-2), "mismatch vs bf16 reference"
    # Looser sanity check vs the full-f32 PyTorch-equivalent forward.
    ref_f = temporal_block_ref(x, params, kernel_size=K, dilation=DIL, padding=PAD)
    assert jnp.allclose(out, ref_f, atol=5e-2, rtol=5e-2), "mismatch vs f32 reference"

    # --- Test 2: lane-aligned blocks (T = N*L = 128) + chained channels-major
    #     bf16 pipeline: (8 -> 16 with downsample) then (16 -> 16, identity
    #     residual), converting layout only at the model boundary. --------------
    N2, C2_IN, C2_MID, L2 = 4, 8, 16, 32
    x2 = jax.random.normal(k_x2, (N2, C2_IN, L2), jnp.float32)
    pa = make_params(k_pa, C2_IN, C2_MID, K)
    pb = make_params(k_pb, C2_MID, C2_MID, K, with_downsample=False)

    fa = prepare_temporal_block_params(pa, kernel_size=K, c_in=C2_IN)
    fb = prepare_temporal_block_params(pb, kernel_size=K, c_in=C2_MID)
    x2_cm = jnp.transpose(x2, (1, 0, 2)).reshape(C2_IN, N2 * L2).astype(jnp.bfloat16)
    h_cm = temporal_block_cm(x2_cm, fa, kernel_size=K, dilation=DIL, padding=PAD,
                             n=N2, length=L2)                      # bf16 hand-off
    y_cm = temporal_block_cm(h_cm, fb, kernel_size=K, dilation=DIL, padding=PAD,
                             n=N2, length=L2, out_dtype=jnp.float32)
    y = jax.block_until_ready(
        jnp.transpose(y_cm.reshape(C2_MID, N2, L2), (1, 0, 2)))
    assert y.shape == (N2, C2_MID, L2)

    r1 = temporal_block_ref(x2, pa, kernel_size=K, dilation=DIL, padding=PAD,
                            operand_dtype=jnp.bfloat16)
    r1 = r1.astype(jnp.bfloat16).astype(jnp.float32)               # mirror bf16 hand-off
    r2 = temporal_block_ref(r1, pb, kernel_size=K, dilation=DIL, padding=PAD,
                            operand_dtype=jnp.bfloat16)
    assert jnp.allclose(y, r2, atol=2e-2, rtol=2e-2), "mismatch vs chained reference"

    print("KERNEL_OK")
</pallas_src>

<mosaic_0001>
module attributes {stable_mosaic.version = 11 : i64} {
  func.func @temporal_block_kernel(%arg0: i32, %arg1: memref<4x32xbf16, #tpu.memory_space<vmem>>, %arg2: memref<3x8x4xbf16, #tpu.memory_space<vmem>>, %arg3: memref<8x1xf32, #tpu.memory_space<vmem>>, %arg4: memref<3x8x8xbf16, #tpu.memory_space<vmem>>, %arg5: memref<8x1xf32, #tpu.memory_space<vmem>>, %arg6: memref<8x4xbf16, #tpu.memory_space<vmem>>, %arg7: memref<8x1xf32, #tpu.memory_space<vmem>>, %arg8: memref<8x32xf32, #tpu.memory_space<vmem>>) attributes {dimension_semantics = [#tpu.dimension_semantics<parallel>], iteration_bounds = array<i64: 1>, scalar_prefetch = 0 : i64, scratch_operands = 0 : i64, tpu.core_type = #tpu.core_type<tc>, window_params = [{transform_indices = @transform_0, window_bounds = array<i64: 4, 32>}, {pipeline_mode = #tpu.pipeline_mode<synchronous>, transform_indices = @transform_1, window_bounds = array<i64: 3, 8, 4>}, {pipeline_mode = #tpu.pipeline_mode<synchronous>, transform_indices = @transform_2, window_bounds = array<i64: 8, 1>}, {pipeline_mode = #tpu.pipeline_mode<synchronous>, transform_indices = @transform_3, window_bounds = array<i64: 3, 8, 8>}, {pipeline_mode = #tpu.pipeline_mode<synchronous>, transform_indices = @transform_4, window_bounds = array<i64: 8, 1>}, {pipeline_mode = #tpu.pipeline_mode<synchronous>, transform_indices = @transform_5, window_bounds = array<i64: 8, 4>}, {pipeline_mode = #tpu.pipeline_mode<synchronous>, transform_indices = @transform_6, window_bounds = array<i64: 8, 1>}, {transform_indices = @transform_7, window_bounds = array<i64: 8, 32>}]} {
    %c0 = arith.constant 0 : index
    %c0_0 = arith.constant 0 : index
    %0 = vector.load %arg1[%c0, %c0_0] : memref<4x32xbf16, #tpu.memory_space<vmem>>, vector<4x32xbf16>
    %1 = tpu.iota {dimensions = array<i32: 1>} : vector<1x32xi32>
    %c16_i32 = arith.constant 16 : i32
    %c0_i32 = arith.constant 0 : i32
    %2 = arith.cmpi eq, %c16_i32, %c0_i32 : i32
    %c1_i32 = arith.constant 1 : i32
    %3 = arith.select %2, %c1_i32, %c16_i32 : i32
    %4 = vector.broadcast %3 : i32 to vector<1x32xi32>
    %5 = arith.remsi %1, %4 : vector<1x32xi32>
    %c0_i32_1 = arith.constant 0 : i32
    %6 = vector.broadcast %c0_i32_1 : i32 to vector<1x32xi32>
    %7 = arith.cmpi ne, %5, %6 : vector<1x32xi32>
    %c0_i32_2 = arith.constant 0 : i32
    %8 = vector.broadcast %c0_i32_2 : i32 to vector<1x32xi32>
    %9 = arith.cmpi slt, %5, %8 : vector<1x32xi32>
    %c0_i32_3 = arith.constant 0 : i32
    %10 = arith.cmpi slt, %3, %c0_i32_3 : i32
    %11 = vector.broadcast %10 : i1 to vector<1x32xi1>
    %12 = vector.broadcast %11 : vector<1x32xi1> to vector<1x32xi1>
    %13 = arith.xori %9, %12 : vector<1x32xi1>
    %14 = arith.andi %13, %7 : vector<1x32xi1>
    %15 = vector.broadcast %3 : i32 to vector<1x32xi32>
    %16 = arith.addi %5, %15 : vector<1x32xi32>
    %17 = arith.select %14, %16, %5 : vector<1x32xi1>, vector<1x32xi32>
    %c2_i32 = arith.constant 2 : i32
    %18 = vector.broadcast %c2_i32 : i32 to vector<1x32xi32>
    %19 = arith.cmpi sge, %17, %18 : vector<1x32xi32>
    %c4_i32 = arith.constant 4 : i32
    %20 = vector.broadcast %c4_i32 : i32 to vector<1x32xi32>
    %21 = arith.cmpi sge, %17, %20 : vector<1x32xi32>
    %22 = vector.extract_strided_slice %0 {offsets = [0, 28], sizes = [4, 4], strides = [1, 1]} : vector<4x32xbf16> to vector<4x4xbf16>
    %23 = vector.extract_strided_slice %0 {offsets = [0, 0], sizes = [4, 28], strides = [1, 1]} : vector<4x32xbf16> to vector<4x28xbf16>
    %24 = tpu.concatenate %22, %23 in 1 : vector<4x4xbf16>, vector<4x28xbf16> -> vector<4x32xbf16>
    %cst = arith.constant 0.000000e+00 : bf16
    %25 = vector.broadcast %cst : bf16 to vector<4x32xbf16>
    %26 = vector.shape_cast %21 : vector<1x32xi1> to vector<1x32xi1>
    %27 = vector.broadcast %26 : vector<1x32xi1> to vector<4x32xi1>
    %28 = arith.select %27, %24, %25 : vector<4x32xi1>, vector<4x32xbf16>
    %c0_4 = arith.constant 0 : index
    %c0_5 = arith.constant 0 : index
    %c0_6 = arith.constant 0 : index
    %29 = vector.load %arg2[%c0_4, %c0_5, %c0_6] : memref<3x8x4xbf16, #tpu.memory_space<vmem>>, vector<1x8x4xbf16>
    %30 = vector.shape_cast %29 : vector<1x8x4xbf16> to vector<8x4xbf16>
    %cst_7 = arith.constant dense<0.000000e+00> : vector<8x32xf32>
    %31 = tpu.matmul %30, %28, %cst_7 {dimension_numbers = #tpu.dot_dimension_numbers<[1], [0], [0], [1], [0, 0, 1, 1], [], []>} : vector<8x4xbf16>, vector<4x32xbf16>, vector<8x32xf32> -> vector<8x32xf32>
    %32 = vector.extract_strided_slice %0 {offsets = [0, 30], sizes = [4, 2], strides = [1, 1]} : vector<4x32xbf16> to vector<4x2xbf16>
    %33 = vector.extract_strided_slice %0 {offsets = [0, 0], sizes = [4, 30], strides = [1, 1]} : vector<4x32xbf16> to vector<4x30xbf16>
    %34 = tpu.concatenate %32, %33 in 1 : vector<4x2xbf16>, vector<4x30xbf16> -> vector<4x32xbf16>
    %cst_8 = arith.constant 0.000000e+00 : bf16
    %35 = vector.broadcast %cst_8 : bf16 to vector<4x32xbf16>
    %36 = vector.shape_cast %19 : vector<1x32xi1> to vector<1x32xi1>
    %37 = vector.broadcast %36 : vector<1x32xi1> to vector<4x32xi1>
    %38 = arith.select %37, %34, %35 : vector<4x32xi1>, vector<4x32xbf16>
    %c1 = arith.constant 1 : index
    %c0_9 = arith.constant 0 : index
    %c0_10 = arith.constant 0 : index
    %39 = vector.load %arg2[%c1, %c0_9, %c0_10] : memref<3x8x4xbf16, #tpu.memory_space<vmem>>, vector<1x8x4xbf16>
    %40 = vector.shape_cast %39 : vector<1x8x4xbf16> to vector<8x4xbf16>
    %cst_11 = arith.constant dense<0.000000e+00> : vector<8x32xf32>
    %41 = tpu.matmul %40, %38, %cst_11 {dimension_numbers = #tpu.dot_dimension_numbers<[1], [0], [0], [1], [0, 0, 1, 1], [], []>} : vector<8x4xbf16>, vector<4x32xbf16>, vector<8x32xf32> -> vector<8x32xf32>
    %42 = arith.addf %31, %41 : vector<8x32xf32>
    %c2 = arith.constant 2 : index
    %c0_12 = arith.constant 0 : index
    %c0_13 = arith.constant 0 : index
    %43 = vector.load %arg2[%c2, %c0_12, %c0_13] : memref<3x8x4xbf16, #tpu.memory_space<vmem>>, vector<1x8x4xbf16>
    %44 = vector.shape_cast %43 : vector<1x8x4xbf16> to vector<8x4xbf16>
    %cst_14 = arith.constant dense<0.000000e+00> : vector<8x32xf32>
    %45 = tpu.matmul %44, %0, %cst_14 {dimension_numbers = #tpu.dot_dimension_numbers<[1], [0], [0], [1], [0, 0, 1, 1], [], []>} : vector<8x4xbf16>, vector<4x32xbf16>, vector<8x32xf32> -> vector<8x32xf32>
    %46 = arith.addf %42, %45 : vector<8x32xf32>
    %c0_15 = arith.constant 0 : index
    %c0_16 = arith.constant 0 : index
    %47 = vector.load %arg3[%c0_15, %c0_16] : memref<8x1xf32, #tpu.memory_space<vmem>>, vector<8x1xf32>
    %48 = vector.broadcast %47 : vector<8x1xf32> to vector<8x32xf32>
    %49 = arith.addf %46, %48 : vector<8x32xf32>
    %cst_17 = arith.constant 0.000000e+00 : f32
    %50 = vector.broadcast %cst_17 : f32 to vector<8x32xf32>
    %51 = arith.maximumf %49, %50 : vector<8x32xf32>
    %52 = arith.truncf %51 : vector<8x32xf32> to vector<8x32xbf16>
    %53 = vector.extract_strided_slice %52 {offsets = [0, 28], sizes = [8, 4], strides = [1, 1]} : vector<8x32xbf16> to vector<8x4xbf16>
    %54 = vector.extract_strided_slice %52 {offsets = [0, 0], sizes = [8, 28], strides = [1, 1]} : vector<8x32xbf16> to vector<8x28xbf16>
    %55 = tpu.concatenate %53, %54 in 1 : vector<8x4xbf16>, vector<8x28xbf16> -> vector<8x32xbf16>
    %cst_18 = arith.constant 0.000000e+00 : bf16
    %56 = vector.broadcast %cst_18 : bf16 to vector<8x32xbf16>
    %57 = vector.shape_cast %21 : vector<1x32xi1> to vector<1x32xi1>
    %58 = vector.broadcast %57 : vector<1x32xi1> to vector<8x32xi1>
    %59 = arith.select %58, %55, %56 : vector<8x32xi1>, vector<8x32xbf16>
    %c0_19 = arith.constant 0 : index
    %c0_20 = arith.constant 0 : index
    %c0_21 = arith.constant 0 : index
    %60 = vector.load %arg4[%c0_19, %c0_20, %c0_21] : memref<3x8x8xbf16, #tpu.memory_space<vmem>>, vector<1x8x8xbf16>
    %61 = vector.shape_cast %60 : vector<1x8x8xbf16> to vector<8x8xbf16>
    %cst_22 = arith.constant dense<0.000000e+00> : vector<8x32xf32>
    %62 = tpu.matmul %61, %59, %cst_22 {dimension_numbers = #tpu.dot_dimension_numbers<[1], [0], [0], [1], [0, 0, 1, 1], [], []>} : vector<8x8xbf16>, vector<8x32xbf16>, vector<8x32xf32> -> vector<8x32xf32>
    %63 = vector.extract_strided_slice %52 {offsets = [0, 30], sizes = [8, 2], strides = [1, 1]} : vector<8x32xbf16> to vector<8x2xbf16>
    %64 = vector.extract_strided_slice %52 {offsets = [0, 0], sizes = [8, 30], strides = [1, 1]} : vector<8x32xbf16> to vector<8x30xbf16>
    %65 = tpu.concatenate %63, %64 in 1 : vector<8x2xbf16>, vector<8x30xbf16> -> vector<8x32xbf16>
    %cst_23 = arith.constant 0.000000e+00 : bf16
    %66 = vector.broadcast %cst_23 : bf16 to vector<8x32xbf16>
    %67 = vector.shape_cast %19 : vector<1x32xi1> to vector<1x32xi1>
    %68 = vector.broadcast %67 : vector<1x32xi1> to vector<8x32xi1>
    %69 = arith.select %68, %65, %66 : vector<8x32xi1>, vector<8x32xbf16>
    %c1_24 = arith.constant 1 : index
    %c0_25 = arith.constant 0 : index
    %c0_26 = arith.constant 0 : index
    %70 = vector.load %arg4[%c1_24, %c0_25, %c0_26] : memref<3x8x8xbf16, #tpu.memory_space<vmem>>, vector<1x8x8xbf16>
    %71 = vector.shape_cast %70 : vector<1x8x8xbf16> to vector<8x8xbf16>
    %cst_27 = arith.constant dense<0.000000e+00> : vector<8x32xf32>
    %72 = tpu.matmul %71, %69, %cst_27 {dimension_numbers = #tpu.dot_dimension_numbers<[1], [0], [0], [1], [0, 0, 1, 1], [], []>} : vector<8x8xbf16>, vector<8x32xbf16>, vector<8x32xf32> -> vector<8x32xf32>
    %73 = arith.addf %62, %72 : vector<8x32xf32>
    %c2_28 = arith.constant 2 : index
    %c0_29 = arith.constant 0 : index
    %c0_30 = arith.constant 0 : index
    %74 = vector.load %arg4[%c2_28, %c0_29, %c0_30] : memref<3x8x8xbf16, #tpu.memory_space<vmem>>, vector<1x8x8xbf16>
    %75 = vector.shape_cast %74 : vector<1x8x8xbf16> to vector<8x8xbf16>
    %cst_31 = arith.constant dense<0.000000e+00> : vector<8x32xf32>
    %76 = tpu.matmul %75, %52, %cst_31 {dimension_numbers = #tpu.dot_dimension_numbers<[1], [0], [0], [1], [0, 0, 1, 1], [], []>} : vector<8x8xbf16>, vector<8x32xbf16>, vector<8x32xf32> -> vector<8x32xf32>
    %77 = arith.addf %73, %76 : vector<8x32xf32>
    %c0_32 = arith.constant 0 : index
    %c0_33 = arith.constant 0 : index
    %78 = vector.load %arg5[%c0_32, %c0_33] : memref<8x1xf32, #tpu.memory_space<vmem>>, vector<8x1xf32>
    %79 = vector.broadcast %78 : vector<8x1xf32> to vector<8x32xf32>
    %80 = arith.addf %77, %79 : vector<8x32xf32>
    %cst_34 = arith.constant 0.000000e+00 : f32
    %81 = vector.broadcast %cst_34 : f32 to vector<8x32xf32>
    %82 = arith.maximumf %80, %81 : vector<8x32xf32>
    %c0_35 = arith.constant 0 : index
    %c0_36 = arith.constant 0 : index
    %83 = vector.load %arg6[%c0_35, %c0_36] : memref<8x4xbf16, #tpu.memory_space<vmem>>, vector<8x4xbf16>
    %cst_37 = arith.constant dense<0.000000e+00> : vector<8x32xf32>
    %84 = tpu.matmul %83, %0, %cst_37 {dimension_numbers = #tpu.dot_dimension_numbers<[1], [0], [0], [1], [0, 0, 1, 1], [], []>} : vector<8x4xbf16>, vector<4x32xbf16>, vector<8x32xf32> -> vector<8x32xf32>
    %c0_38 = arith.constant 0 : index
    %c0_39 = arith.constant 0 : index
    %85 = vector.load %arg7[%c0_38, %c0_39] : memref<8x1xf32, #tpu.memory_space<vmem>>, vector<8x1xf32>
    %86 = vector.broadcast %85 : vector<8x1xf32> to vector<8x32xf32>
    %87 = arith.addf %84, %86 : vector<8x32xf32>
    %88 = arith.addf %82, %87 : vector<8x32xf32>
    %cst_40 = arith.constant 0.000000e+00 : f32
    %89 = vector.broadcast %cst_40 : f32 to vector<8x32xf32>
    %90 = arith.maximumf %88, %89 : vector<8x32xf32>
    %c0_41 = arith.constant 0 : index
    %c0_42 = arith.constant 0 : index
    %91 = vector.load %arg8[%c0_41, %c0_42] : memref<8x32xf32, #tpu.memory_space<vmem>>, vector<8x32xf32>
    tpu.vector_store %arg8[%c0_41, %c0_42], %90 {strides = array<i32>} : memref<8x32xf32, #tpu.memory_space<vmem>>, vector<8x32xf32>,
    return
  }
  func.func @transform_0(%arg0: i32) -> (i32, i32) {
    %c0_i32 = arith.constant 0 : i32
    %c0_i32_0 = arith.constant 0 : i32
    return %c0_i32, %arg0 : i32, i32
  }
  func.func @transform_1(%arg0: i32) -> (i32, i32, i32) {
    %c0_i32 = arith.constant 0 : i32
    %c0_i32_0 = arith.constant 0 : i32
    %c0_i32_1 = arith.constant 0 : i32
    %c0_i32_2 = arith.constant 0 : i32
    return %c0_i32, %c0_i32_0, %c0_i32_1 : i32, i32, i32
  }
  func.func @transform_2(%arg0: i32) -> (i32, i32) {
    %c0_i32 = arith.constant 0 : i32
    %c0_i32_0 = arith.constant 0 : i32
    %c0_i32_1 = arith.constant 0 : i32
    return %c0_i32, %c0_i32_0 : i32, i32
  }
  func.func @transform_3(%arg0: i32) -> (i32, i32, i32) {
    %c0_i32 = arith.constant 0 : i32
    %c0_i32_0 = arith.constant 0 : i32
    %c0_i32_1 = arith.constant 0 : i32
    %c0_i32_2 = arith.constant 0 : i32
    return %c0_i32, %c0_i32_0, %c0_i32_1 : i32, i32, i32
  }
  func.func @transform_4(%arg0: i32) -> (i32, i32) {
    %c0_i32 = arith.constant 0 : i32
    %c0_i32_0 = arith.constant 0 : i32
    %c0_i32_1 = arith.constant 0 : i32
    return %c0_i32, %c0_i32_0 : i32, i32
  }
  func.func @transform_5(%arg0: i32) -> (i32, i32) {
    %c0_i32 = arith.constant 0 : i32
    %c0_i32_0 = arith.constant 0 : i32
    %c0_i32_1 = arith.constant 0 : i32
    return %c0_i32, %c0_i32_0 : i32, i32
  }
  func.func @transform_6(%arg0: i32) -> (i32, i32) {
    %c0_i32 = arith.constant 0 : i32
    %c0_i32_0 = arith.constant 0 : i32
    %c0_i32_1 = arith.constant 0 : i32
    return %c0_i32, %c0_i32_0 : i32, i32
  }
  func.func @transform_7(%arg0: i32) -> (i32, i32) {
    %c0_i32 = arith.constant 0 : i32
    %c0_i32_0 = arith.constant 0 : i32
    return %c0_i32, %arg0 : i32, i32
  }
}

</mosaic_0001>

<llo_original>
// kernel: tpu_custom_call.1
$region0: #{tpu_custom_call.1}
  #allocation0 [shape = 'u32[]', space=smem, size = 0x4, offset = 0x4, fixed_abs, tag = 'smem constant byte address 0x4 - core index']
  #allocation1 [shape = 'u32[72,128]{1,0:T(1,128)}', space=vmem, size = 0x9000, scoped, tag = 'internal scratch']
  %s0 = inlined_call_operand.vmem [shape: bf16[4,32], index: 0, kind: input, shape index: {}]
  %s1 = inlined_call_operand.vmem [shape: bf16[3,8,4], index: 1, kind: input, shape index: {}]
  %s2 = inlined_call_operand.vmem [shape: f32[8,1], index: 2, kind: input, shape index: {}]
  %s3 = inlined_call_operand.vmem [shape: bf16[3,8,8], index: 3, kind: input, shape index: {}]
  %s4 = inlined_call_operand.vmem [shape: f32[8,1], index: 4, kind: input, shape index: {}]
  %s5 = inlined_call_operand.vmem [shape: bf16[8,4], index: 5, kind: input, shape index: {}]
  %s6 = inlined_call_operand.vmem [shape: f32[8,1], index: 6, kind: input, shape index: {}]
  %s7 = inlined_call_operand.hbm [shape: f32[8,32], index: 7, kind: output, shape index: {}]
  %s8 = sld [smem:[#allocation0]]
  $region38: #{tpu_custom_call.1} parent=0
    _
  %s10 = ssub.s32 1, %s8
  %s11 = scalar_select 0, %s10, %s8
  $region1: #{tpu_custom_call.1} parent=0
    #allocation2 [shape = 'u8[4096]{0}', space=vmem, size = 0x1000, scoped, tag = 'output window, operand 0, single buffered']
    #allocation3 [shape = 's32[1]{0}', space=sflag, size = 0x4, scoped, tag = 'scoped memory for tpu_custom_call.1']
    %12 = vsyncpa [#allocation3], 0
    // Predicated region
    $region2: #{tpu_custom_call.1} parent=1 // pred_check
      _
    $region3: #{tpu_custom_call.1} parent=1 // pred_check_branch
      %14 = sbr.rel (0) target = $region5
    $region4: #{tpu_custom_call.1} parent=1 // pred_region
      _
    $region5: #{tpu_custom_call.1} parent=1 // pred_fallthru
      _
    // Predicated region
    $region6: #{tpu_custom_call.1} parent=1 // pred_check
      _
    $region7: #{tpu_custom_call.1} parent=1 // pred_check_branch
      %16 = sbr.rel (0) target = $region9
    $region8: #{tpu_custom_call.1} parent=1 // pred_region
      _
    $region9: #{tpu_custom_call.1} parent=1 // pred_fallthru
      _
    // Predicated region
    $region10: #{tpu_custom_call.1} parent=1 // pred_check
      _
    $region11: #{tpu_custom_call.1} parent=1 // pred_check_branch
      %18 = sbr.rel (0) target = $region13
    $region12: #{tpu_custom_call.1} parent=1 // pred_region
      _
    $region13: #{tpu_custom_call.1} parent=1 // pred_fallthru
      _
    // Predicated region
    $region14: #{tpu_custom_call.1} parent=1 // pred_check
      _
    $region15: #{tpu_custom_call.1} parent=1 // pred_check_branch
      %20 = sbr.rel (0) target = $region17
    $region16: #{tpu_custom_call.1} parent=1 // pred_region
      _
    $region17: #{tpu_custom_call.1} parent=1 // pred_fallthru
      _
    // Predicated region
    $region18: #{tpu_custom_call.1} parent=1 // pred_check
      _
    $region19: #{tpu_custom_call.1} parent=1 // pred_check_branch
      %22 = sbr.rel (0) target = $region21
    $region20: #{tpu_custom_call.1} parent=1 // pred_region
      _
    $region21: #{tpu_custom_call.1} parent=1 // pred_fallthru
      _
    // Predicated region
    $region22: #{tpu_custom_call.1} parent=1 // pred_check
      _
    $region23: #{tpu_custom_call.1} parent=1 // pred_check_branch
      %24 = sbr.rel (0) target = $region25
    $region24: #{tpu_custom_call.1} parent=1 // pred_region
      _
    $region25: #{tpu_custom_call.1} parent=1 // pred_fallthru
      _
    // Predicated region
    $region26: #{tpu_custom_call.1} parent=1 // pred_check
      _
    $region27: #{tpu_custom_call.1} parent=1 // pred_check_branch
      %26 = sbr.rel (0) target = $region29
    $region28: #{tpu_custom_call.1} parent=1 // pred_region
      _
    $region29: #{tpu_custom_call.1} parent=1 // pred_fallthru
      _
    %v28 = vld [vmem:[%s0] sm:$0x3]
    %v29 = vlaneseq
    %v30 = vand.u32 %v29, 127
    %vm31 = vcmp.lt.s32.totalorder %v30, 0
    %v32 = vsub.s32 0, %v30
    %v33 = vsel %vm31, %v32, %v30
    %v34 = vshrl.u32 %v33, 4
    %v35 = vand.u32 %v33, 15
    %v36 = vsub.s32 0, %v35
    %v37 = vsel %vm31, %v36, %v35
    %vm38 = vcmp.ne.s32.totalorder %v37, 0
    %vm39 = vcmp.lt.s32.totalorder %v37, 0
    %vm40 = vmand %vm39, %vm38
    %v41 = vadd.s32 %v37, 16
    %v42 = vsel %vm40, %v41, %v37
    %vm43 = vcmp.ge.s32.totalorder %v42, 2
    %vm44 = vcmp.ge.s32.totalorder %v42, 4
    %46 = vst [vmem:[#allocation1] ss:$4 sm:$0xff] %v28
    %v47 = vld.sshfl [vmem:[#allocation1] sm:$0xff pattern:$0x73625140]
    %49 = vrot.lane.b32.xlu0 %v47, 100
    %v50 = vpop.permute.xlu0 %49
    %51 = vst [vmem:[#allocation1] ss:$4 sm:$0xff] %v28
    %v52 = vld.sshfl [vmem:[#allocation1] sm:$0xff pattern:$0x73625140]
    %54 = vrot.lane.b32.xlu0 %v52, 4
    %v55 = vpop.permute.xlu0 %54
    %vm56 = vcmask 31744
    %v59 = vsel %vm56, %v50, %v55
    %v61 = vsel %vm44, 1, 0
    %vm62 = vcmp.eq.s32.totalorder %v61, 1
    %vm63 = vmpackc.low %vm62, %vm62
    %v64 = vsel %vm63, %v59, 0
    %v65 = vld [vmem:[%s1] sm:$0xf]
    %66 = vst [vmem:[#allocation1] ss:$4 sm:$0xff] %v28
    %v67 = vld.sshfl [vmem:[#allocation1] sm:$0xff pattern:$0x73625140]
    %69 = vrot.lane.b32.xlu0 %v67, 98
    %v70 = vpop.permute.xlu0 %69
    %71 = vst [vmem:[#allocation1] ss:$4 sm:$0xff] %v28
    %v72 = vld.sshfl [vmem:[#allocation1] sm:$0xff pattern:$0x73625140]
    %74 = vrot.lane.b32.xlu0 %v72, 2
    %v75 = vpop.permute.xlu0 %74
    %vm76 = vcmask 15360
    %v79 = vsel %vm76, %v70, %v75
    %v81 = vsel %vm43, 1, 0
    %vm82 = vcmp.eq.s32.totalorder %v81, 1
    %vm83 = vmpackc.low %vm82, %vm82
    %v84 = vsel %vm83, %v79, 0
    %s85 = scalar_lea.vmem %s1, 4
    %v86 = vld [vmem:[%s85] sm:$0xf]
    %v88 = vsel %vm56, %v86, 0
    %vm90 = vcmask 1041408
    %v92 = vsel %vm90, %v84, 0
    %94 = vmatpush.bf16.msra.mxu0 0
    %95 = vmatpush.bf16.msra.mxu0 0
    %96 = vmatpush.bf16.msra.mxu0 0
    %97 = vmatpush.bf16.msra.mxu0 0
    %98 = vmatpush.bf16.msra.mxu0 0
    %99 = vmatpush.bf16.msra.mxu0 0
    %100 = vmatpush.bf16.msra.mxu0 0
    %101 = vmatpush.bf16.msra.mxu0 %v92
    %102 = vmatmul.bf16.gmra.mxu0 %v88
    %v103 = vpop.f32.mrf.mxu0
    %v104 = vadd.f32 0.0, %v103
    %v105 = vpop.f32.mrf.mxu0
    %106 = vdwg.mxu0
    %v108 = vsel %vm56, %v65, 0
    %v111 = vsel %vm90, %v64, 0
    %113 = vmatpush.bf16.msra.mxu0 0
    %114 = vmatpush.bf16.msra.mxu0 0
    %115 = vmatpush.bf16.msra.mxu0 0
    %116 = vmatpush.bf16.msra.mxu0 0
    %117 = vmatpush.bf16.msra.mxu0 0
    %118 = vmatpush.bf16.msra.mxu0 0
    %119 = vmatpush.bf16.msra.mxu0 0
    %120 = vmatpush.bf16.msra.mxu0 %v111
    %121 = vmatmul.bf16.gmra.mxu0 %v108
    %v122 = vpop.f32.mrf.mxu0
    %v123 = vadd.f32 %v104, %v122
    %v124 = vpop.f32.mrf.mxu0
    %125 = vdwg.mxu0
    %s126 = scalar_lea.vmem %s1, 8
    %v127 = vld [vmem:[%s126] sm:$0xf]
    %v129 = vsel %vm56, %v127, 0
    %v131 = vsel %vm90, %v28, 0
    %133 = vmatpush.bf16.msra.mxu0 0
    %134 = vmatpush.bf16.msra.mxu0 0
    %135 = vmatpush.bf16.msra.mxu0 0
    %136 = vmatpush.bf16.msra.mxu0 0
    %137 = vmatpush.bf16.msra.mxu0 0
    %138 = vmatpush.bf16.msra.mxu0 0
    %139 = vmatpush.bf16.msra.mxu0 0
    %140 = vmatpush.bf16.msra.mxu0 %v131
    %141 = vmatmul.bf16.gmra.mxu0 %v129
    %v142 = vpop.f32.mrf.mxu0
    %v143 = vadd.f32 0.0, %v142
    %v144 = vpop.f32.mrf.mxu0
    %145 = vdwg.mxu0
    %v146 = vadd.f32 %v123, %v143
    %v147 = vld [vmem:[%s2] sm:$0xff]
    %149 = vset.pattern.permute.xlu0 0
    %150 = vperm.xlu0 %149, %v147
    %v151 = vpop.permute.xlu0 %150
    %v153 = vadd.f32 %v146, %v151
    %v154 = vmax.f32 %v153, 0.0
    %v155 = vpack.c.bf16 %v154, %v154
    %v157 = vunpack.c.l.b16 %v155
    %v158 = vpack.c.b16 %v157, %v157
    %159 = vrot.lane.b32.xlu0 %v158, 100
    %v160 = vpop.permute.xlu0 %159
    %161 = vrot.lane.b32.xlu0 %v158, 4
    %v162 = vpop.permute.xlu0 %161
    %v165 = vsel %vm56, %v160, %v162
    %v167 = vsel %vm63, %v165, 0
    %v168 = vld [vmem:[%s3] sm:$0xf]
    %169 = vrot.lane.b32.xlu0 %v158, 98
    %v170 = vpop.permute.xlu0 %169
    %171 = vrot.lane.b32.xlu0 %v158, 2
    %v172 = vpop.permute.xlu0 %171
    %v175 = vsel %vm76, %v170, %v172
    %v177 = vsel %vm83, %v175, 0
    %s178 = scalar_lea.vmem %s3, 4
    %v179 = vld [vmem:[%s178] sm:$0xf]
    %vm180 = vcmask 64512
    %v182 = vsel %vm180, %v179, 0
    %vm184 = vcmask 1043456
    %v186 = vsel %vm184, %v177, 0
    %188 = vmatpush.bf16.msra.mxu0 0
    %189 = vmatpush.bf16.msra.mxu0 0
    %190 = vmatpush.bf16.msra.mxu0 0
    %191 = vmatpush.bf16.msra.mxu0 0
    %192 = vmatpush.bf16.msra.mxu0 0
    %193 = vmatpush.bf16.msra.mxu0 0
    %194 = vmatpush.bf16.msra.mxu0 0
    %195 = vmatpush.bf16.msra.mxu0 %v186
    %196 = vmatmul.bf16.gmra.mxu0 %v182
    %v197 = vpop.f32.mrf.mxu0
    %v198 = vadd.f32 0.0, %v197
    %v199 = vpop.f32.mrf.mxu0
    %200 = vdwg.mxu0
    %v202 = vsel %vm180, %v168, 0
    %v205 = vsel %vm184, %v167, 0
    %207 = vmatpush.bf16.msra.mxu0 0
    %208 = vmatpush.bf16.msra.mxu0 0
    %209 = vmatpush.bf16.msra.mxu0 0
    %210 = vmatpush.bf16.msra.mxu0 0
    %211 = vmatpush.bf16.msra.mxu0 0
    %212 = vmatpush.bf16.msra.mxu0 0
    %213 = vmatpush.bf16.msra.mxu0 0
    %214 = vmatpush.bf16.msra.mxu0 %v205
    %215 = vmatmul.bf16.gmra.mxu0 %v202
    %v216 = vpop.f32.mrf.mxu0
    %v217 = vadd.f32 %v198, %v216
    %v218 = vpop.f32.mrf.mxu0
    %219 = vdwg.mxu0
    %s220 = scalar_lea.vmem %s3, 8
    %v221 = vld [vmem:[%s220] sm:$0xf]
    %v223 = vsel %vm180, %v221, 0
    %v226 = vsel %vm184, %v155, 0
    %228 = vmatpush.bf16.msra.mxu0 0
    %229 = vmatpush.bf16.msra.mxu0 0
    %230 = vmatpush.bf16.msra.mxu0 0
    %231 = vmatpush.bf16.msra.mxu0 0
    %232 = vmatpush.bf16.msra.mxu0 0
    %233 = vmatpush.bf16.msra.mxu0 0
    %234 = vmatpush.bf16.msra.mxu0 0
    %235 = vmatpush.bf16.msra.mxu0 %v226
    %236 = vmatmul.bf16.gmra.mxu0 %v223
    %v237 = vpop.f32.mrf.mxu0
    %v238 = vadd.f32 0.0, %v237
    %v239 = vpop.f32.mrf.mxu0
    %240 = vdwg.mxu0
    %v241 = vadd.f32 %v217, %v238
    %v242 = vld [vmem:[%s4] sm:$0xff]
    %244 = vset.pattern.permute.xlu0 0
    %245 = vperm.xlu0 %244, %v242
    %v246 = vpop.permute.xlu0 %245
    %v248 = vadd.f32 %v241, %v246
    %v249 = vmax.f32 %v248, 0.0
    %v250 = vld [vmem:[%s5] sm:$0xf]
    %v251 = vld [vmem:[%s6] sm:$0xff]
    %253 = vset.pattern.permute.xlu0 0
    %254 = vperm.xlu0 %253, %v251
    %v255 = vpop.permute.xlu0 %254
    %v258 = vsel %vm56, %v250, 0
    %260 = vmatpush.bf16.msra.mxu0 0
    %261 = vmatpush.bf16.msra.mxu0 0
    %262 = vmatpush.bf16.msra.mxu0 0
    %263 = vmatpush.bf16.msra.mxu0 0
    %264 = vmatpush.bf16.msra.mxu0 0
    %265 = vmatpush.bf16.msra.mxu0 0
    %266 = vmatpush.bf16.msra.mxu0 0
    %267 = vmatpush.bf16.msra.mxu0 %v131
    %268 = vmatmul.bf16.gmra.mxu0 %v258
    %v269 = vpop.f32.mrf.mxu0
    %v270 = vadd.f32 %v255, %v269
    %v271 = vpop.f32.mrf.mxu0
    %272 = vdwg.mxu0
    %v273 = vadd.f32 %v249, %v270
    %v274 = vmax.f32 %v273, 0.0
    %vm275 = vcmask 261120
    %276 = vst.msk [vmem:[#allocation2] sm:$0xff] %vm275, %v274
    // Predicated region
    $region30: #{tpu_custom_call.1} parent=1 // pred_check
      _
    $region31: #{tpu_custom_call.1} parent=1 // pred_check_branch
      %278 = sbr.rel (0) target = $region33
    $region32: #{tpu_custom_call.1} parent=1 // pred_region
      %280 = vsyncadd [#allocation3], 0
      %s282 = sshll.u32 [#allocation2], 4
      %s283 = int_to_ptr.vmem [resolvable:$true] %s282
      %s284 = sshll.u32 %s7, 4
      %s285 = int_to_ptr.hbm [resolvable:$true] %s284
      %287 = dma.vmem_to_hbm [thread:$0]  %s283, 128, %s285, [#allocation3]
    $region33: #{tpu_custom_call.1} parent=1 // pred_fallthru
      _
    // Predicated region
    $region34: #{tpu_custom_call.1} parent=1 // pred_check
      _
    $region35: #{tpu_custom_call.1} parent=1 // pred_check_branch
      %289 = sbr.rel (0) target = $region37
    $region36: #{tpu_custom_call.1} parent=1 // pred_region
      %291 = dma.done [#allocation3], 128
    $region37: #{tpu_custom_call.1} parent=1 // pred_fallthru
      _
    %292 = vsyncpa [#allocation3], 1

</llo_original>
